<compile_context>
chip_gen: v5e
topology: v5e:2x2
jax: 0.10.0
libtpu: 0.0.40
codegen_flags: <defaults>
</compile_context>

<pallas_src>
import functools

import jax
import jax.numpy as jnp
from jax.experimental import pallas as pl
from jax.experimental.pallas import tpu as pltpu

LANE = 128  # TPU lane width: feature dims and N are zero-padded to multiples of this.


def _pick_tm(n_pad):
    """Largest row-tile size in {512, 256, 128} that divides the padded N."""
    for cand in (512, 256, 128):
        if n_pad % cand == 0:
            return cand
    return n_pad  # unreachable: n_pad is always a multiple of 128


def _gcn_grid_kernel(a_ref, x_ref, w_ref, scale_ref, shift_ref, o_ref,
                     h_f32, h_bf16, *, tm):
    """One grid step = one (layer, row-tile): rows <- relu(bn((A_tile @ h) @ W [+ h_rows]))."""
    l = pl.program_id(0)   # layer index (outer, sequential)
    i = pl.program_id(1)   # row-tile index (inner)

    @pl.when(jnp.logical_and(l == 0, i == 0))
    def _():
        h_f32[...] = x_ref[...]                       # layer-0 input -> resident h (f32)

    @pl.when(i == 0)
    def _():
        # Frozen bf16 snapshot of this layer's input for the MXU.  Row tiles only
        # overwrite h_f32, so the snapshot stays valid for the whole layer.
        h_bf16[...] = h_f32[...].astype(jnp.bfloat16)

    # Aggregate + transform this row tile: bf16 MXU operands, f32 accumulation.
    ah = jnp.dot(a_ref[...], h_bf16[...], preferred_element_type=jnp.float32)   # [tm, LANE]
    new = jnp.dot(ah.astype(jnp.bfloat16), w_ref[0],
                  preferred_element_type=jnp.float32)                           # [tm, LANE]

    row0 = pl.multiple_of(i * tm, tm)
    h_prev = h_f32[pl.ds(row0, tm), :]                 # this layer's input rows (f32)
    new = jnp.where(l > 0, new + h_prev, new)          # residual (skipped for layer 0)
    new = new * scale_ref[0] + shift_ref[0]            # eval-mode BN (+ folded GCN bias)
    new = jnp.maximum(new, 0.0)                        # ReLU (dropout identity at inference)

    h_f32[pl.ds(row0, tm), :] = new                    # update resident h in place
    o_ref[...] = new                                   # final layer's write is what survives


def build_norm_adj(edge_index, num_nodes):
    """Dense D^-1/2 (A + I) D^-1/2 from an edge list (symmetrized)."""
    src, dst = edge_index[0], edge_index[1]
    a = jnp.zeros((num_nodes, num_nodes), jnp.float32)
    a = a.at[src, dst].set(1.0)
    a = a.at[dst, src].set(1.0)  # treat graph as undirected
    idx = jnp.arange(num_nodes)
    a = a.at[idx, idx].set(1.0)  # add self loops
    deg = a.sum(axis=1)
    d_inv_sqrt = 1.0 / jnp.sqrt(deg)
    return a * d_inv_sqrt[:, None] * d_inv_sqrt[None, :]


def enhanced_food_drug_gnn_forward(x, edge_index, params):
    """Full forward pass: one pallas_call over a (layer, row-tile) grid."""
    n, input_dim = x.shape
    num_layers = len(params)
    hidden = params[0][0].shape[1]
    assert input_dim <= LANE and hidden <= LANE, "feature dims must fit one lane tile"

    # Pad N to a lane multiple: lane-dense A tiles, unmasked loads/stores.
    n_pad = ((n + LANE - 1) // LANE) * LANE
    tm = _pick_tm(n_pad)
    n_tiles = n_pad // tm

    # Normalized adjacency, zero-padded (padded rows/cols are zero so they never
    # contaminate real rows), cast to bf16 for the MXU.
    a_hat = build_norm_adj(edge_index, n)
    a_pad = jnp.zeros((n_pad, n_pad), jnp.float32).at[:n, :n].set(a_hat)
    a_bf16 = a_pad.astype(jnp.bfloat16)

    # Lane-/row-padded node features (layer-0 h), kept f32.
    x_pad = jnp.zeros((n_pad, LANE), jnp.float32).at[:n, :input_dim].set(x)

    # Stack + lane-pad per-layer params; fold GCN bias into BN shift.
    # Padded lanes carry scale = shift = 0 so padded feature columns stay exactly 0.
    w_stack = jnp.zeros((num_layers, LANE, LANE), jnp.float32)
    scale_stack = jnp.zeros((num_layers, 1, LANE), jnp.float32)
    shift_stack = jnp.zeros((num_layers, 1, LANE), jnp.float32)
    for l, (w, b, scale, shift) in enumerate(params):
        k = w.shape[0]
        w_stack = w_stack.at[l, :k, :hidden].set(w)
        scale_stack = scale_stack.at[l, 0, :hidden].set(scale.reshape(-1))
        shift_stack = shift_stack.at[l, 0, :hidden].set(
            (b * scale + shift).reshape(-1))           # bias folded: shift' = b*scale + shift
    w_bf16 = w_stack.astype(jnp.bfloat16)

    # VMEM budget (double-buffered pipeline inputs/outputs + resident scratch) + headroom.
    needed = (2 * tm * n_pad * 2            # A row tiles (bf16, double-buffered)
              + 2 * n_pad * LANE * 4        # x (f32)
              + 2 * LANE * LANE * 2         # W slice (bf16)
              + 2 * 2 * LANE * 4            # scale/shift slices
              + 2 * tm * LANE * 4           # output tile
              + n_pad * LANE * (4 + 2))     # h scratch: f32 master + bf16 snapshot
    vmem_limit = int(min(max(2 * needed, 8 << 20), 96 << 20))

    # Advisory cost estimate (padded = actual executed work).
    flops = num_layers * (2 * n_pad * n_pad * LANE
                          + 2 * n_pad * LANE * LANE
                          + 4 * n_pad * LANE)
    bytes_accessed = (num_layers * n_pad * n_pad * 2     # A re-streamed each layer (bf16)
                      + n_pad * LANE * 4                  # x
                      + num_layers * (LANE * LANE * 2 + 2 * LANE * 4)
                      + num_layers * n_pad * LANE * 4)    # output writes

    grid_spec = pltpu.PrefetchScalarGridSpec(
        num_scalar_prefetch=0,
        grid=(num_layers, n_tiles),                        # layers outer, row tiles inner
        in_specs=[
            pl.BlockSpec((tm, n_pad), lambda l, i: (i, 0)),        # A row tiles (streamed)
            pl.BlockSpec((n_pad, LANE), lambda l, i: (0, 0)),      # x (fetched once, resident)
            pl.BlockSpec((1, LANE, LANE), lambda l, i: (l, 0, 0)),  # W_l
            pl.BlockSpec((1, 1, LANE), lambda l, i: (l, 0, 0)),     # scale_l
            pl.BlockSpec((1, 1, LANE), lambda l, i: (l, 0, 0)),     # shift_l (bias folded)
        ],
        out_specs=pl.BlockSpec((tm, LANE), lambda l, i: (i, 0)),
        scratch_shapes=[
            pltpu.VMEM((n_pad, LANE), jnp.float32),    # resident h (f32 master)
            pltpu.VMEM((n_pad, LANE), jnp.bfloat16),   # per-layer bf16 snapshot for the MXU
        ],
    )

    out_pad = pl.pallas_call(
        functools.partial(_gcn_grid_kernel, tm=tm),
        out_shape=jax.ShapeDtypeStruct((n_pad, LANE), jnp.float32),
        grid_spec=grid_spec,
        compiler_params=pltpu.CompilerParams(
            # Row tiles share the resident h scratch -> both axes sequential.
            dimension_semantics=("arbitrary", "arbitrary"),
            vmem_limit_bytes=vmem_limit,
        ),
        cost_estimate=pl.CostEstimate(flops=int(flops), transcendentals=0,
                                      bytes_accessed=int(bytes_accessed)),
    )(a_bf16, x_pad, w_bf16, scale_stack, shift_stack)

    # Slice the padded rows / lanes off host-side.
    return out_pad[:n, :hidden]


def _reference_forward(x, a_hat, params):
    """Pure-JAX f32 reference of the eval-mode PyTorch forward."""
    h = x
    for l, (w, b, scale, shift) in enumerate(params):
        y = a_hat @ (h @ w) + b
        if l > 0:
            y = y + h
        y = y * scale + shift
        h = jnp.maximum(y, 0.0)
    return h


if __name__ == "__main__":
    N = 16          # number of graph nodes
    INPUT_DIM = 16  # input node feature dim
    HIDDEN = 32     # hidden_channels
    NUM_LAYERS = 3
    EPS = 1e-5

    keys = iter(jax.random.split(jax.random.PRNGKey(0), 32))

    # node features
    x = jax.random.normal(next(keys), (N, INPUT_DIM), jnp.float32)

    # deterministic edges: ring + chord (directed list; symmetrized inside)
    src = jnp.arange(N, dtype=jnp.int32)
    edge_index = jnp.stack(
        [jnp.concatenate([src, src]),
         jnp.concatenate([(src + 1) % N, (src + 3) % N])]
    )

    # deterministic parameters (per layer: GCN weight/bias + folded BatchNorm)
    dims_in = [INPUT_DIM] + [HIDDEN] * (NUM_LAYERS - 1)
    params = []
    for i in range(NUM_LAYERS):
        w = 0.1 * jax.random.normal(next(keys), (dims_in[i], HIDDEN), jnp.float32)
        b = 0.1 * jax.random.normal(next(keys), (1, HIDDEN), jnp.float32)
        gamma = 1.0 + 0.1 * jax.random.normal(next(keys), (1, HIDDEN), jnp.float32)
        beta = 0.1 * jax.random.normal(next(keys), (1, HIDDEN), jnp.float32)
        running_mean = jnp.zeros((1, HIDDEN), jnp.float32)
        running_var = jnp.ones((1, HIDDEN), jnp.float32)
        scale = gamma / jnp.sqrt(running_var + EPS)
        shift = beta - running_mean * scale
        params.append((w, b, scale, shift))

    out = enhanced_food_drug_gnn_forward(x, edge_index, params)
    out = jax.block_until_ready(out)
    assert out.shape == (N, HIDDEN) and out.dtype == jnp.float32

    # Loose-tolerance check vs. the f32 reference (kernel uses bf16 MXU operands).
    ref = _reference_forward(x, build_norm_adj(edge_index, N), params)
    max_err = float(jnp.max(jnp.abs(out - ref)))
    assert max_err < 5e-2, f"max abs error vs reference: {max_err}"

    print("KERNEL_OK")
</pallas_src>

<mosaic_0001>
module attributes {stable_mosaic.version = 11 : i64} {
  func.func @_gcn_grid_kernel(%arg0: i32, %arg1: i32, %arg2: memref<128x128xbf16, #tpu.memory_space<vmem>>, %arg3: memref<128x128xf32, #tpu.memory_space<vmem>>, %arg4: memref<1x128x128xbf16, #tpu.memory_space<vmem>>, %arg5: memref<1x1x128xf32, #tpu.memory_space<vmem>>, %arg6: memref<1x1x128xf32, #tpu.memory_space<vmem>>, %arg7: memref<128x128xf32, #tpu.memory_space<vmem>>, %arg8: memref<128x128xf32, #tpu.memory_space<vmem>>, %arg9: memref<128x128xbf16, #tpu.memory_space<vmem>>) attributes {dimension_semantics = [#tpu.dimension_semantics<arbitrary>, #tpu.dimension_semantics<arbitrary>], iteration_bounds = array<i64: 3, 1>, scalar_prefetch = 0 : i64, scratch_operands = 2 : i64, tpu.core_type = #tpu.core_type<tc>, window_params = [{transform_indices = @transform_0, window_bounds = array<i64: 128, 128>}, {pipeline_mode = #tpu.pipeline_mode<synchronous>, transform_indices = @transform_1, window_bounds = array<i64: 128, 128>}, {transform_indices = @transform_2, window_bounds = array<i64: 1, 128, 128>}, {transform_indices = @transform_3, window_bounds = array<i64: 1, 1, 128>}, {transform_indices = @transform_4, window_bounds = array<i64: 1, 1, 128>}, {transform_indices = @transform_5, window_bounds = array<i64: 128, 128>}]} {
    %c0_i32 = arith.constant 0 : i32
    %0 = arith.cmpi eq, %arg0, %c0_i32 : i32
    %c0_i32_0 = arith.constant 0 : i32
    %1 = arith.cmpi eq, %arg1, %c0_i32_0 : i32
    %2 = arith.andi %0, %1 : i1
    %3 = arith.extui %2 : i1 to i32
    %c0_i32_1 = arith.constant 0 : i32
    %4 = arith.cmpi ne, %3, %c0_i32_1 : i32
    scf.if %4 {
      %c0_23 = arith.constant 0 : index
      %c0_24 = arith.constant 0 : index
      %35 = vector.load %arg3[%c0_23, %c0_24] : memref<128x128xf32, #tpu.memory_space<vmem>>, vector<128x128xf32>
      %c0_25 = arith.constant 0 : index
      %c0_26 = arith.constant 0 : index
      %36 = vector.load %arg8[%c0_25, %c0_26] : memref<128x128xf32, #tpu.memory_space<vmem>>, vector<128x128xf32>
      tpu.vector_store %arg8[%c0_25, %c0_26], %35 {strides = array<i32>} : memref<128x128xf32, #tpu.memory_space<vmem>>, vector<128x128xf32>,
    } else {
    }
    %c0_i32_2 = arith.constant 0 : i32
    %5 = arith.cmpi eq, %arg1, %c0_i32_2 : i32
    %6 = arith.extui %5 : i1 to i32
    %c0_i32_3 = arith.constant 0 : i32
    %7 = arith.cmpi ne, %6, %c0_i32_3 : i32
    scf.if %7 {
      %c0_23 = arith.constant 0 : index
      %c0_24 = arith.constant 0 : index
      %35 = vector.load %arg8[%c0_23, %c0_24] : memref<128x128xf32, #tpu.memory_space<vmem>>, vector<128x128xf32>
      %36 = arith.truncf %35 : vector<128x128xf32> to vector<128x128xbf16>
      %c0_25 = arith.constant 0 : index
      %c0_26 = arith.constant 0 : index
      %37 = vector.load %arg9[%c0_25, %c0_26] : memref<128x128xbf16, #tpu.memory_space<vmem>>, vector<128x128xbf16>
      tpu.vector_store %arg9[%c0_25, %c0_26], %36 {strides = array<i32>} : memref<128x128xbf16, #tpu.memory_space<vmem>>, vector<128x128xbf16>,
    } else {
    }
    %c0 = arith.constant 0 : index
    %c0_4 = arith.constant 0 : index
    %8 = vector.load %arg2[%c0, %c0_4] : memref<128x128xbf16, #tpu.memory_space<vmem>>, vector<128x128xbf16>
    %c0_5 = arith.constant 0 : index
    %c0_6 = arith.constant 0 : index
    %9 = vector.load %arg9[%c0_5, %c0_6] : memref<128x128xbf16, #tpu.memory_space<vmem>>, vector<128x128xbf16>
    %cst = arith.constant dense<0.000000e+00> : vector<128x128xf32>
    %10 = tpu.matmul %8, %9, %cst {dimension_numbers = #tpu.dot_dimension_numbers<[1], [0], [0], [1], [0, 0, 1, 1], [], []>} : vector<128x128xbf16>, vector<128x128xbf16>, vector<128x128xf32> -> vector<128x128xf32>
    %11 = arith.truncf %10 : vector<128x128xf32> to vector<128x128xbf16>
    %c0_7 = arith.constant 0 : index
    %c0_8 = arith.constant 0 : index
    %c0_9 = arith.constant 0 : index
    %12 = vector.load %arg4[%c0_7, %c0_8, %c0_9] : memref<1x128x128xbf16, #tpu.memory_space<vmem>>, vector<1x128x128xbf16>
    %13 = vector.shape_cast %12 : vector<1x128x128xbf16> to vector<128x128xbf16>
    %cst_10 = arith.constant dense<0.000000e+00> : vector<128x128xf32>
    %14 = tpu.matmul %11, %13, %cst_10 {dimension_numbers = #tpu.dot_dimension_numbers<[1], [0], [0], [1], [0, 0, 1, 1], [], []>} : vector<128x128xbf16>, vector<128x128xbf16>, vector<128x128xf32> -> vector<128x128xf32>
    %c128_i32 = arith.constant 128 : i32
    %15 = arith.muli %arg1, %c128_i32 : i32
    %16 = tpu.assume_multiple %15, 128 : i32
    %17 = arith.index_cast %16 : i32 to index
    %c0_11 = arith.constant 0 : index
    %18 = vector.load %arg8[%17, %c0_11] : memref<128x128xf32, #tpu.memory_space<vmem>>, vector<128x128xf32>
    %c0_i32_12 = arith.constant 0 : i32
    %19 = arith.cmpi sgt, %arg0, %c0_i32_12 : i32
    %20 = arith.addf %14, %18 : vector<128x128xf32>
    %21 = arith.select %19, %20, %14 : vector<128x128xf32>
    %c0_13 = arith.constant 0 : index
    %c0_14 = arith.constant 0 : index
    %c0_15 = arith.constant 0 : index
    %22 = vector.load %arg5[%c0_13, %c0_14, %c0_15] : memref<1x1x128xf32, #tpu.memory_space<vmem>>, vector<1x1x128xf32>
    %23 = vector.shape_cast %22 : vector<1x1x128xf32> to vector<1x128xf32>
    %24 = vector.broadcast %23 : vector<1x128xf32> to vector<128x128xf32>
    %25 = arith.mulf %21, %24 : vector<128x128xf32>
    %c0_16 = arith.constant 0 : index
    %c0_17 = arith.constant 0 : index
    %c0_18 = arith.constant 0 : index
    %26 = vector.load %arg6[%c0_16, %c0_17, %c0_18] : memref<1x1x128xf32, #tpu.memory_space<vmem>>, vector<1x1x128xf32>
    %27 = vector.shape_cast %26 : vector<1x1x128xf32> to vector<1x128xf32>
    %28 = vector.broadcast %27 : vector<1x128xf32> to vector<128x128xf32>
    %29 = arith.addf %25, %28 : vector<128x128xf32>
    %cst_19 = arith.constant 0.000000e+00 : f32
    %30 = vector.broadcast %cst_19 : f32 to vector<128x128xf32>
    %31 = arith.maximumf %29, %30 : vector<128x128xf32>
    %32 = arith.index_cast %16 : i32 to index
    %c0_20 = arith.constant 0 : index
    %33 = vector.load %arg8[%32, %c0_20] : memref<128x128xf32, #tpu.memory_space<vmem>>, vector<128x128xf32>
    tpu.vector_store %arg8[%32, %c0_20], %31 {strides = array<i32>} : memref<128x128xf32, #tpu.memory_space<vmem>>, vector<128x128xf32>,
    %c0_21 = arith.constant 0 : index
    %c0_22 = arith.constant 0 : index
    %34 = vector.load %arg7[%c0_21, %c0_22] : memref<128x128xf32, #tpu.memory_space<vmem>>, vector<128x128xf32>
    tpu.vector_store %arg7[%c0_21, %c0_22], %31 {strides = array<i32>} : memref<128x128xf32, #tpu.memory_space<vmem>>, vector<128x128xf32>,
    return
  }
  func.func @transform_0(%arg0: i32, %arg1: i32) -> (i32, i32) {
    %c0_i32 = arith.constant 0 : i32
    %c0_i32_0 = arith.constant 0 : i32
    return %arg1, %c0_i32 : i32, i32
  }
  func.func @transform_1(%arg0: i32, %arg1: i32) -> (i32, i32) {
    %c0_i32 = arith.constant 0 : i32
    %c0_i32_0 = arith.constant 0 : i32
    %c0_i32_1 = arith.constant 0 : i32
    return %c0_i32, %c0_i32_0 : i32, i32
  }
  func.func @transform_2(%arg0: i32, %arg1: i32) -> (i32, i32, i32) {
    %c0_i32 = arith.constant 0 : i32
    %c0_i32_0 = arith.constant 0 : i32
    %c0_i32_1 = arith.constant 0 : i32
    return %arg0, %c0_i32, %c0_i32_0 : i32, i32, i32
  }
  func.func @transform_3(%arg0: i32, %arg1: i32) -> (i32, i32, i32) {
    %c0_i32 = arith.constant 0 : i32
    %c0_i32_0 = arith.constant 0 : i32
    %c0_i32_1 = arith.constant 0 : i32
    return %arg0, %c0_i32, %c0_i32_0 : i32, i32, i32
  }
  func.func @transform_4(%arg0: i32, %arg1: i32) -> (i32, i32, i32) {
    %c0_i32 = arith.constant 0 : i32
    %c0_i32_0 = arith.constant 0 : i32
    %c0_i32_1 = arith.constant 0 : i32
    return %arg0, %c0_i32, %c0_i32_0 : i32, i32, i32
  }
  func.func @transform_5(%arg0: i32, %arg1: i32) -> (i32, i32) {
    %c0_i32 = arith.constant 0 : i32
    %c0_i32_0 = arith.constant 0 : i32
    return %arg1, %c0_i32 : i32, i32
  }
}

</mosaic_0001>

<llo_original>
// kernel: tpu_custom_call.1
$region0: #{tpu_custom_call.1}
  #allocation0 [shape = 'u32[]', space=smem, size = 0x4, offset = 0x4, fixed_abs, tag = 'smem constant byte address 0x4 - core index']
  #allocation1 [shape = 'u32[72,128]{1,0:T(1,128)}', space=vmem, size = 0x9000, scoped, tag = 'internal scratch']
  #allocation2 [shape = 'f32[128,128]{1,0:T(8,128)}', space=vmem, size = 0x10000, scoped, tag = 'scratch operand']
  #allocation3 [shape = 'bf16[128,128]{1,0:T(8,128)(2,1)}', space=vmem, size = 0x8000, scoped, tag = 'scratch operand']
  %s0 = inlined_call_operand.hbm [shape: bf16[128,128], index: 0, kind: input, shape index: {}]
  %s1 = inlined_call_operand.hbm [shape: f32[128,128], index: 1, kind: input, shape index: {}]
  %s2 = inlined_call_operand.hbm [shape: bf16[3,128,128], index: 2, kind: input, shape index: {}]
  %s3 = inlined_call_operand.hbm [shape: f32[3,1,128], index: 3, kind: input, shape index: {}]
  %s4 = inlined_call_operand.vmem [shape: f32[3,1,128], index: 4, kind: input, shape index: {}]
  %s5 = inlined_call_operand.hbm [shape: f32[128,128], index: 5, kind: output, shape index: {}]
  %s6 = sld [smem:[#allocation0]]
  $region77: #{tpu_custom_call.1} parent=0
    _
  %s8 = ssub.s32 1, %s6
  %s9 = scalar_select 0, %s8, %s6
  $region1: #{tpu_custom_call.1} parent=0
    #allocation4 [shape = 'u8[32768]{0}', space=vmem, size = 0x8000, scoped, tag = 'input window, operand 0, single buffered']
    #allocation5 [shape = 's32[2]{0}', space=sflag, size = 0x8, scoped, tag = 'scoped memory for tpu_custom_call.1']
    #allocation6 [shape = 's32[2]{0}', space=sflag, size = 0x8, scoped, tag = 'scoped memory for tpu_custom_call.1']
    #allocation7 [shape = 'u8[65536]{0}', space=vmem, size = 0x10000, scoped, tag = 'input window, operand 1, single buffered']
    #allocation8 [shape = 's32[1]{0}', space=sflag, size = 0x4, scoped, tag = 'scoped memory for tpu_custom_call.1']
    #allocation9 [shape = 'u8[65536]{0}', space=vmem, size = 0x10000, scoped, tag = 'input window, operand 2']
    #allocation10 [shape = 'u8[1024]{0}', space=vmem, size = 0x400, scoped, tag = 'input window, operand 3']
    #allocation11 [shape = 'u8[65536]{0}', space=vmem, size = 0x10000, scoped, tag = 'output window, operand 0, single buffered']
    %10 = vsyncpa [#allocation5], 0
    %11 = vsyncpa [#allocation8], 0
    %12 = vsyncpa [#allocation6], 0
    loop: start=0, step=1, limit=5
    $region2: #{tpu_custom_call.1} parent=1 // loop_pre_header
      _
    $region3: #{tpu_custom_call.1} parent=1 // loop_header
      %s14 = sphi 0, %s18
      %p15 = scmp.ge.s32.totalorder %s14, 5
      %s21 = sphi 0, %s33
      %s22 = sphi 0, %s29
      %s23 = sphi 0, %s21
      %s24 = sphi 0, %s22
      %s25 = sphi 0, %s23
      %s26 = sphi 0, %s24
      %s36 = sphi 0, %s38
      %s39 = sphi 0, %s36
      %s40 = sphi 0, %s39
      %s56 = sphi 0, %s40
      %s60 = sphi 0, %s60
      %s62 = sphi 0, %s60
      %s63 = sphi 0, %s62
      %s77 = sphi 0, %s63
      %s83 = sphi 0, %s85
      %s86 = sphi 0, %s83
      %s87 = sphi 0, %s86
      %s103 = sphi 0, %s87
      %s109 = sphi 0, %s111
      %s112 = sphi 0, %s109
      %s113 = sphi 0, %s112
      %s129 = sphi 0, %s113
      %s135 = sphi 0, %s137
      %s138 = sphi 0, %s135
      %s139 = sphi 0, %s138
      %s155 = sphi 0, %s139
      %s161 = sphi 0, %s163
      %s164 = sphi 0, %s161
      %s165 = sphi 0, %s164
      %s181 = sphi 0, %s165
    $region4: #{tpu_custom_call.1} parent=1 // loop_header_branch
      %17 = sbr.rel (%p15) target = $region8
    $region5: #{tpu_custom_call.1} parent=1 // loop_body
      %s19 = ssub.s32 %s14, 1
      %s20 = ssub.s32 %s14, 2
      %s27 = sadd.s32 1, %s22
      %p28 = scmp.ge.s32.totalorder %s27, 1
      %s29 = scalar_select %p28, 0, %s27
      %s30 = sadd.s32 1, %s21
      %s31 = scalar_select %p28, %s30, %s21
      %p32 = scmp.ge.s32.totalorder %s31, 3
      %s33 = scalar_select %p32, 0, %s31
      %s34 = ssub.s32 %s22, %s29
      %p35 = scmp.eq.s32.totalorder %s34, 0
      %s37 = sadd.s32 %s36, 1
      %s38 = scalar_select %p35, %s36, %s37
      %p41 = pneg %p35
      %p42 = scmp.eq.s32.totalorder %s14, 2
      %p43 = por %p41, %p42
      %p44 = scmp.ne.s32.totalorder %s36, %s39
      %p45 = scmp.eq.s32.totalorder %s14, 0
      %p46 = por %p44, %p45
      %p47 = scmp.ne.s32.totalorder %s36, %s39
      %p48 = scmp.eq.s32.totalorder %s19, 2
      %p49 = por %p47, %p48
      %p50 = scmp.ne.s32.totalorder %s39, %s40
      %p51 = scmp.eq.s32.totalorder %s19, 0
      %p52 = por %p50, %p51
      %p53 = scmp.ne.s32.totalorder %s39, %s40
      %p54 = scmp.eq.s32.totalorder %s20, 2
      %p55 = por %p53, %p54
      %p57 = scmp.ne.s32.totalorder %s40, %s56
      %p58 = scmp.eq.s32.totalorder %s20, 0
      %p59 = por %p57, %p58
      %s61 = sadd.s32 %s60, 1
      %p64 = scmp.eq.s32.totalorder %s14, 2
      %p65 = scmp.ne.s32.totalorder %s60, %s62
      %p66 = scmp.eq.s32.totalorder %s14, 0
      %p67 = por %p65, %p66
      %p68 = scmp.ne.s32.totalorder %s60, %s62
      %p69 = scmp.eq.s32.totalorder %s19, 2
      %p70 = por %p68, %p69
      %p71 = scmp.ne.s32.totalorder %s62, %s63
      %p72 = scmp.eq.s32.totalorder %s19, 0
      %p73 = por %p71, %p72
      %p74 = scmp.ne.s32.totalorder %s62, %s63
      %p75 = scmp.eq.s32.totalorder %s20, 2
      %p76 = por %p74, %p75
      %p78 = scmp.ne.s32.totalorder %s63, %s77
      %p79 = scmp.eq.s32.totalorder %s20, 0
      %p80 = por %p78, %p79
      %s81 = ssub.s32 %s21, %s33
      %p82 = scmp.eq.s32.totalorder %s81, 0
      %s84 = sadd.s32 %s83, 1
      %s85 = scalar_select %p82, %s83, %s84
      %p88 = pneg %p82
      %p89 = scmp.eq.s32.totalorder %s14, 2
      %p90 = por %p88, %p89
      %p91 = scmp.ne.s32.totalorder %s83, %s86
      %p92 = scmp.eq.s32.totalorder %s14, 0
      %p93 = por %p91, %p92
      %p94 = scmp.ne.s32.totalorder %s83, %s86
      %p95 = scmp.eq.s32.totalorder %s19, 2
      %p96 = por %p94, %p95
      %p97 = scmp.ne.s32.totalorder %s86, %s87
      %p98 = scmp.eq.s32.totalorder %s19, 0
      %p99 = por %p97, %p98
      %p100 = scmp.ne.s32.totalorder %s86, %s87
      %p101 = scmp.eq.s32.totalorder %s20, 2
      %p102 = por %p100, %p101
      %p104 = scmp.ne.s32.totalorder %s87, %s103
      %p105 = scmp.eq.s32.totalorder %s20, 0
      %p106 = por %p104, %p105
      %s107 = ssub.s32 %s21, %s33
      %p108 = scmp.eq.s32.totalorder %s107, 0
      %s110 = sadd.s32 %s109, 1
      %s111 = scalar_select %p108, %s109, %s110
      %p114 = pneg %p108
      %p115 = scmp.eq.s32.totalorder %s14, 2
      %p116 = por %p114, %p115
      %p117 = scmp.ne.s32.totalorder %s109, %s112
      %p118 = scmp.eq.s32.totalorder %s14, 0
      %p119 = por %p117, %p118
      %p120 = scmp.ne.s32.totalorder %s109, %s112
      %p121 = scmp.eq.s32.totalorder %s19, 2
      %p122 = por %p120, %p121
      %p123 = scmp.ne.s32.totalorder %s112, %s113
      %p124 = scmp.eq.s32.totalorder %s19, 0
      %p125 = por %p123, %p124
      %p126 = scmp.ne.s32.totalorder %s112, %s113
      %p127 = scmp.eq.s32.totalorder %s20, 2
      %p128 = por %p126, %p127
      %p130 = scmp.ne.s32.totalorder %s113, %s129
      %p131 = scmp.eq.s32.totalorder %s20, 0
      %p132 = por %p130, %p131
      %s133 = ssub.s32 %s21, %s33
      %p134 = scmp.eq.s32.totalorder %s133, 0
      %s136 = sadd.s32 %s135, 1
      %s137 = scalar_select %p134, %s135, %s136
      %p140 = pneg %p134
      %p141 = scmp.eq.s32.totalorder %s14, 2
      %p142 = por %p140, %p141
      %p143 = scmp.ne.s32.totalorder %s135, %s138
      %p144 = scmp.eq.s32.totalorder %s14, 0
      %p145 = por %p143, %p144
      %p146 = scmp.ne.s32.totalorder %s135, %s138
      %p147 = scmp.eq.s32.totalorder %s19, 2
      %p148 = por %p146, %p147
      %p149 = scmp.ne.s32.totalorder %s138, %s139
      %p150 = scmp.eq.s32.totalorder %s19, 0
      %p151 = por %p149, %p150
      %p152 = scmp.ne.s32.totalorder %s138, %s139
      %p153 = scmp.eq.s32.totalorder %s20, 2
      %p154 = por %p152, %p153
      %p156 = scmp.ne.s32.totalorder %s139, %s155
      %p157 = scmp.eq.s32.totalorder %s20, 0
      %p158 = por %p156, %p157
      %s159 = ssub.s32 %s22, %s29
      %p160 = scmp.eq.s32.totalorder %s159, 0
      %s162 = sadd.s32 %s161, 1
      %s163 = scalar_select %p160, %s161, %s162
      %p166 = pneg %p160
      %p167 = scmp.eq.s32.totalorder %s14, 2
      %p168 = por %p166, %p167
      %p169 = scmp.ne.s32.totalorder %s161, %s164
      %p170 = scmp.eq.s32.totalorder %s14, 0
      %p171 = por %p169, %p170
      %p172 = scmp.ne.s32.totalorder %s161, %s164
      %p173 = scmp.eq.s32.totalorder %s19, 2
      %p174 = por %p172, %p173
      %p175 = scmp.ne.s32.totalorder %s164, %s165
      %p176 = scmp.eq.s32.totalorder %s19, 0
      %p177 = por %p175, %p176
      %p178 = scmp.ne.s32.totalorder %s164, %s165
      %p179 = scmp.eq.s32.totalorder %s20, 2
      %p180 = por %p178, %p179
      %p182 = scmp.ne.s32.totalorder %s165, %s181
      %p183 = scmp.eq.s32.totalorder %s20, 0
      %p184 = por %p182, %p183
      %p185 = scmp.le.s32.totalorder 1, %s14
      %p186 = scmp.lt.s32.totalorder %s14, 4
      %p187 = pnand %p185, %p186
      %p188 = pneg %p187
      // Predicated region
      $region9: #{tpu_custom_call.1} parent=5 // pred_check
        _
      $region10: #{tpu_custom_call.1} parent=5 // pred_check_branch
        %190 = sbr.rel (%p187) target = $region12
      $region11: #{tpu_custom_call.1} parent=5 // pred_region
        %s191 = ssub.s32 %s14, 1
        // Predicated region
        $region13: #{tpu_custom_call.1} parent=11 // pred_check
          %p192 = pneg %p52
        $region14: #{tpu_custom_call.1} parent=11 // pred_check_branch
          %194 = sbr.rel (%p192) target = $region16
        $region15: #{tpu_custom_call.1} parent=11 // pred_region
          %s195 = smul.u32 16, %s24
          %197 = vsyncadd [#allocation5], 0
          %s198 = smul.addr %s195, 4
          %s199 = scalar_lea.hbm %s0, %s198
          %s200 = sshll.u32 %s199, 4
          %s201 = int_to_ptr.hbm [resolvable:$true] %s200
          %s202 = sshll.u32 [#allocation4], 4
          %s203 = int_to_ptr.vmem [resolvable:$true] %s202
          %208 = dma.hbm_to_vmem [thread:$0]  %s201, 1024, %s203, [#allocation5], 64, 64, 4
        $region16: #{tpu_custom_call.1} parent=11 // pred_fallthru
          _
        // Predicated region
        $region17: #{tpu_custom_call.1} parent=11 // pred_check
          %p209 = pneg %p73
        $region18: #{tpu_custom_call.1} parent=11 // pred_check_branch
          %211 = sbr.rel (%p209) target = $region20
        $region19: #{tpu_custom_call.1} parent=11 // pred_region
          %213 = vsyncadd [#allocation8], 0
          %s214 = sshll.u32 %s1, 4
          %s215 = int_to_ptr.hbm [resolvable:$true] %s214
          %s216 = sshll.u32 [#allocation7], 4
          %s217 = int_to_ptr.vmem [resolvable:$true] %s216
          %222 = dma.hbm_to_vmem [thread:$0]  %s215, 2048, %s217, [#allocation8], 128, 128, 8
        $region20: #{tpu_custom_call.1} parent=11 // pred_fallthru
          _
      $region12: #{tpu_custom_call.1} parent=5 // pred_fallthru
        _
      %p223 = scmp.lt.s32.totalorder %s14, 3
      // Predicated region
      $region21: #{tpu_custom_call.1} parent=5 // pred_check
        %p224 = pneg %p223
      $region22: #{tpu_custom_call.1} parent=5 // pred_check_branch
        %226 = sbr.rel (%p224) target = $region24
      $region23: #{tpu_custom_call.1} parent=5 // pred_region
        // Predicated region
        $region25: #{tpu_custom_call.1} parent=23 // pred_check
          %p227 = pneg %p93
        $region26: #{tpu_custom_call.1} parent=23 // pred_check_branch
          %229 = sbr.rel (%p227) target = $region28
        $region27: #{tpu_custom_call.1} parent=23 // pred_region
          %s230 = sand.u32 %s14, 1
          %s231 = scalar_lea.sflag [#allocation5], %s230
          %s232 = sand.u32 %s83, 1
          %s233 = smul.addr %s232, 64
          %s234 = scalar_lea.vmem [#allocation9], %s233
          %236 = vsyncadd %s231, 0
          %s237 = smul.addr %s21, 16
          %s238 = smul.addr %s237, 4
          %s239 = scalar_lea.hbm %s2, %s238
          %s240 = sshll.u32 %s239, 4
          %s241 = int_to_ptr.hbm [resolvable:$true] %s240
          %s242 = sshll.u32 %s234, 4
          %s243 = int_to_ptr.vmem [resolvable:$true] %s242
          %248 = dma.hbm_to_vmem [thread:$0]  %s241, 1024, %s243, %s231, 64, 64, 4
        $region28: #{tpu_custom_call.1} parent=23 // pred_fallthru
          _
        // Predicated region
        $region29: #{tpu_custom_call.1} parent=23 // pred_check
          %p249 = pneg %p119
        $region30: #{tpu_custom_call.1} parent=23 // pred_check_branch
          %251 = sbr.rel (%p249) target = $region32
        $region31: #{tpu_custom_call.1} parent=23 // pred_region
          %s252 = sand.u32 %s14, 1
          %s253 = scalar_lea.sflag [#allocation5], %s252
          %s254 = sand.u32 %s109, 1
          %s255 = scalar_lea.vmem [#allocation10], %s254
          %257 = vsyncadd %s253, 0
          %s258 = scalar_lea.hbm %s3, %s21
          %s260 = sshll.u32 %s258, 4
          %s261 = int_to_ptr.hbm [resolvable:$true] %s260
          %s262 = sshll.u32 %s255, 4
          %s263 = int_to_ptr.vmem [resolvable:$true] %s262
          %265 = dma.hbm_to_vmem [thread:$0]  %s261, 16, %s263, %s253
        $region32: #{tpu_custom_call.1} parent=23 // pred_fallthru
          _
        // Predicated region
        $region33: #{tpu_custom_call.1} parent=23 // pred_check
          %p266 = pneg %p145
        $region34: #{tpu_custom_call.1} parent=23 // pred_check_branch
          %268 = sbr.rel (%p266) target = $region36
        $region35: #{tpu_custom_call.1} parent=23 // pred_region
          %p269 = scmp.lt.s32.totalorder %s21, 2
          %s270 = scalar_select %p269, %s21, 2
          %s271 = scalar_lea.vmem %s4, %s270
        $region36: #{tpu_custom_call.1} parent=23 // pred_fallthru
          _
      $region24: #{tpu_custom_call.1} parent=5 // pred_fallthru
        _
      %p272 = scmp.le.s32.totalorder 1, %s14
      %p273 = scmp.lt.s32.totalorder %s14, 4
      %p274 = pnand %p272, %p273
      %p275 = pneg %p274
      // Predicated region
      $region37: #{tpu_custom_call.1} parent=5 // pred_check
        _
      $region38: #{tpu_custom_call.1} parent=5 // pred_check_branch
        %277 = sbr.rel (%p274) target = $region40
      $region39: #{tpu_custom_call.1} parent=5 // pred_region
        %s278 = ssub.s32 %s14, 1
        // Predicated region
        $region41: #{tpu_custom_call.1} parent=39 // pred_check
          %p279 = pneg %p52
        $region42: #{tpu_custom_call.1} parent=39 // pred_check_branch
          %281 = sbr.rel (%p279) target = $region44
        $region43: #{tpu_custom_call.1} parent=39 // pred_region
          %283 = dma.done [#allocation5], 1024
        $region44: #{tpu_custom_call.1} parent=39 // pred_fallthru
          _
        // Predicated region
        $region45: #{tpu_custom_call.1} parent=39 // pred_check
          %p284 = pneg %p73
        $region46: #{tpu_custom_call.1} parent=39 // pred_check_branch
          %286 = sbr.rel (%p284) target = $region48
        $region47: #{tpu_custom_call.1} parent=39 // pred_region
          %288 = dma.done [#allocation8], 2048
        $region48: #{tpu_custom_call.1} parent=39 // pred_fallthru
          _
        %s289 = sand.u32 %s19, 1
        %s290 = scalar_lea.sflag [#allocation5], %s289
        %s291 = sand.u32 %s86, 1
        %s292 = smul.addr %s291, 64
        %s293 = scalar_lea.vmem [#allocation9], %s292
        // Predicated region
        $region49: #{tpu_custom_call.1} parent=39 // pred_check
          %p294 = pneg %p99
        $region50: #{tpu_custom_call.1} parent=39 // pred_check_branch
          %296 = sbr.rel (%p294) target = $region52
        $region51: #{tpu_custom_call.1} parent=39 // pred_region
          %298 = dma.done %s290, 1024
        $region52: #{tpu_custom_call.1} parent=39 // pred_fallthru
          _
        %s299 = sand.u32 %s19, 1
        %s300 = scalar_lea.sflag [#allocation5], %s299
        %s301 = sand.u32 %s112, 1
        %s302 = scalar_lea.vmem [#allocation10], %s301
        // Predicated region
        $region53: #{tpu_custom_call.1} parent=39 // pred_check
          %p303 = pneg %p125
        $region54: #{tpu_custom_call.1} parent=39 // pred_check_branch
          %305 = sbr.rel (%p303) target = $region56
        $region55: #{tpu_custom_call.1} parent=39 // pred_region
          %307 = dma.done %s300, 16
        $region56: #{tpu_custom_call.1} parent=39 // pred_fallthru
          _
        %p308 = pneg %p52
        %p309 = pneg %p49
        %p310 = pneg %p73
        %p311 = pneg %p70
        %s312 = sand.u32 %s19, 1
        %s313 = scalar_lea.sflag [#allocation5], %s312
        %s314 = sand.u32 %s86, 1
        %s315 = smul.addr %s314, 64
        %s316 = scalar_lea.vmem [#allocation9], %s315
        %p317 = pneg %p99
        %p318 = pneg %p96
        %s319 = sand.u32 %s19, 1
        %s320 = scalar_lea.sflag [#allocation5], %s319
        %s321 = sand.u32 %s112, 1
        %s322 = scalar_lea.vmem [#allocation10], %s321
        %p323 = pneg %p125
        %p324 = pneg %p122
        %p325 = scmp.lt.s32.totalorder %s23, 2
        %s326 = scalar_select %p325, %s23, 2
        %s327 = scalar_lea.vmem %s4, %s326
        %p328 = pneg %p151
        %p329 = pneg %p148
        %p330 = pneg %p177
        %p331 = pneg %p174
        %s332 = smul.u32 16, %s24
        %p333 = scmp.lt.s32.totalorder %s23, 2
        %s334 = scalar_select %p333, %s23, 2
        %s335 = scalar_lea.vmem %s4, %s334
        %s336 = smul.u32 16, %s24
        %p337 = scmp.eq.s32.totalorder %s23, 0
        %p338 = scmp.eq.s32.totalorder %s24, 0
        %p339 = pnand %p337, %p338
        %p340 = pneg %p339
        // Predicated region
        $region57: #{tpu_custom_call.1} parent=39 // pred_check
          _
        $region58: #{tpu_custom_call.1} parent=39 // pred_check_branch
          %342 = sbr.rel (%p339) target = $region60
        $region59: #{tpu_custom_call.1} parent=39 // pred_region
          %v343 = vld [vmem:[#allocation7] sm:$0xff]
          %v344 = vld [vmem:[#allocation7 + $0x8] sm:$0xff]
          %v345 = vld [vmem:[#allocation7 + $0x10] sm:$0xff]
          %v346 = vld [vmem:[#allocation7 + $0x18] sm:$0xff]
          %v347 = vld [vmem:[#allocation7 + $0x20] sm:$0xff]
          %v348 = vld [vmem:[#allocation7 + $0x28] sm:$0xff]
          %v349 = vld [vmem:[#allocation7 + $0x30] sm:$0xff]
          %v350 = vld [vmem:[#allocation7 + $0x38] sm:$0xff]
          %v351 = vld [vmem:[#allocation7 + $0x40] sm:$0xff]
          %v352 = vld [vmem:[#allocation7 + $0x48] sm:$0xff]
          %v353 = vld [vmem:[#allocation7 + $0x50] sm:$0xff]
          %v354 = vld [vmem:[#allocation7 + $0x58] sm:$0xff]
          %v355 = vld [vmem:[#allocation7 + $0x60] sm:$0xff]
          %v356 = vld [vmem:[#allocation7 + $0x68] sm:$0xff]
          %v357 = vld [vmem:[#allocation7 + $0x70] sm:$0xff]
          %v358 = vld [vmem:[#allocation7 + $0x78] sm:$0xff]
          %359 = vst [vmem:[#allocation2] sm:$0xff] %v343
          %360 = vst [vmem:[#allocation2 + $0x8] sm:$0xff] %v344
          %361 = vst [vmem:[#allocation2 + $0x10] sm:$0xff] %v345
          %362 = vst [vmem:[#allocation2 + $0x18] sm:$0xff] %v346
          %363 = vst [vmem:[#allocation2 + $0x20] sm:$0xff] %v347
          %364 = vst [vmem:[#allocation2 + $0x28] sm:$0xff] %v348
          %365 = vst [vmem:[#allocation2 + $0x30] sm:$0xff] %v349
          %366 = vst [vmem:[#allocation2 + $0x38] sm:$0xff] %v350
          %367 = vst [vmem:[#allocation2 + $0x40] sm:$0xff] %v351
          %368 = vst [vmem:[#allocation2 + $0x48] sm:$0xff] %v352
          %369 = vst [vmem:[#allocation2 + $0x50] sm:$0xff] %v353
          %370 = vst [vmem:[#allocation2 + $0x58] sm:$0xff] %v354
          %371 = vst [vmem:[#allocation2 + $0x60] sm:$0xff] %v355
          %372 = vst [vmem:[#allocation2 + $0x68] sm:$0xff] %v356
          %373 = vst [vmem:[#allocation2 + $0x70] sm:$0xff] %v357
          %374 = vst [vmem:[#allocation2 + $0x78] sm:$0xff] %v358
        $region60: #{tpu_custom_call.1} parent=39 // pred_fallthru
          _
        // Predicated region
        $region61: #{tpu_custom_call.1} parent=39 // pred_check
          %p375 = pneg %p338
        $region62: #{tpu_custom_call.1} parent=39 // pred_check_branch
          %377 = sbr.rel (%p375) target = $region64
        $region63: #{tpu_custom_call.1} parent=39 // pred_region
          %v378 = vld [vmem:[#allocation2] sm:$0xff]
          %v379 = vld [vmem:[#allocation2 + $0x8] sm:$0xff]
          %v380 = vld [vmem:[#allocation2 + $0x10] sm:$0xff]
          %v381 = vld [vmem:[#allocation2 + $0x18] sm:$0xff]
          %v382 = vld [vmem:[#allocation2 + $0x20] sm:$0xff]
          %v383 = vld [vmem:[#allocation2 + $0x28] sm:$0xff]
          %v384 = vld [vmem:[#allocation2 + $0x30] sm:$0xff]
          %v385 = vld [vmem:[#allocation2 + $0x38] sm:$0xff]
          %v386 = vld [vmem:[#allocation2 + $0x40] sm:$0xff]
          %v387 = vld [vmem:[#allocation2 + $0x48] sm:$0xff]
          %v388 = vld [vmem:[#allocation2 + $0x50] sm:$0xff]
          %v389 = vld [vmem:[#allocation2 + $0x58] sm:$0xff]
          %v390 = vld [vmem:[#allocation2 + $0x60] sm:$0xff]
          %v391 = vld [vmem:[#allocation2 + $0x68] sm:$0xff]
          %v392 = vld [vmem:[#allocation2 + $0x70] sm:$0xff]
          %v393 = vld [vmem:[#allocation2 + $0x78] sm:$0xff]
          %v394 = vpack.c.bf16 %v378, %v378
          %v395 = vpack.c.bf16 %v379, %v379
          %v396 = vpack.c.bf16 %v380, %v380
          %v397 = vpack.c.bf16 %v381, %v381
          %v398 = vpack.c.bf16 %v382, %v382
          %v399 = vpack.c.bf16 %v383, %v383
          %v400 = vpack.c.bf16 %v384, %v384
          %v401 = vpack.c.bf16 %v385, %v385
          %v402 = vpack.c.bf16 %v386, %v386
          %v403 = vpack.c.bf16 %v387, %v387
          %v404 = vpack.c.bf16 %v388, %v388
          %v405 = vpack.c.bf16 %v389, %v389
          %v406 = vpack.c.bf16 %v390, %v390
          %v407 = vpack.c.bf16 %v391, %v391
          %v408 = vpack.c.bf16 %v392, %v392
          %v409 = vpack.c.bf16 %v393, %v393
          %410 = vst [vmem:[#allocation3] sm:$0xf] %v394
          %411 = vst [vmem:[#allocation3 + $0x4] sm:$0xf] %v395
          %412 = vst [vmem:[#allocation3 + $0x8] sm:$0xf] %v396
          %413 = vst [vmem:[#allocation3 + $0xc] sm:$0xf] %v397
          %414 = vst [vmem:[#allocation3 + $0x10] sm:$0xf] %v398
          %415 = vst [vmem:[#allocation3 + $0x14] sm:$0xf] %v399
          %416 = vst [vmem:[#allocation3 + $0x18] sm:$0xf] %v400
          %417 = vst [vmem:[#allocation3 + $0x1c] sm:$0xf] %v401
          %418 = vst [vmem:[#allocation3 + $0x20] sm:$0xf] %v402
          %419 = vst [vmem:[#allocation3 + $0x24] sm:$0xf] %v403
          %420 = vst [vmem:[#allocation3 + $0x28] sm:$0xf] %v404
          %421 = vst [vmem:[#allocation3 + $0x2c] sm:$0xf] %v405
          %422 = vst [vmem:[#allocation3 + $0x30] sm:$0xf] %v406
          %423 = vst [vmem:[#allocation3 + $0x34] sm:$0xf] %v407
          %424 = vst [vmem:[#allocation3 + $0x38] sm:$0xf] %v408
          %425 = vst [vmem:[#allocation3 + $0x3c] sm:$0xf] %v409
        $region64: #{tpu_custom_call.1} parent=39 // pred_fallthru
          _
        %v426 = vld [vmem:[#allocation4] sm:$0xf]
        %v427 = vld [vmem:[#allocation4 + $0x4] sm:$0xf]
        %v428 = vld [vmem:[#allocation4 + $0x8] sm:$0xf]
        %v429 = vld [vmem:[#allocation4 + $0xc] sm:$0xf]
        %v430 = vld [vmem:[#allocation4 + $0x10] sm:$0xf]
        %v431 = vld [vmem:[#allocation4 + $0x14] sm:$0xf]
        %v432 = vld [vmem:[#allocation4 + $0x18] sm:$0xf]
        %v433 = vld [vmem:[#allocation4 + $0x1c] sm:$0xf]
        %v434 = vld [vmem:[#allocation4 + $0x20] sm:$0xf]
        %v435 = vld [vmem:[#allocation4 + $0x24] sm:$0xf]
        %v436 = vld [vmem:[#allocation4 + $0x28] sm:$0xf]
        %v437 = vld [vmem:[#allocation4 + $0x2c] sm:$0xf]
        %v438 = vld [vmem:[#allocation4 + $0x30] sm:$0xf]
        %v439 = vld [vmem:[#allocation4 + $0x34] sm:$0xf]
        %v440 = vld [vmem:[#allocation4 + $0x38] sm:$0xf]
        %v441 = vld [vmem:[#allocation4 + $0x3c] sm:$0xf]
        %v442 = vld [vmem:[#allocation3] sm:$0xf]
        %v443 = vld [vmem:[#allocation3 + $0x4] sm:$0xf]
        %v444 = vld [vmem:[#allocation3 + $0x8] sm:$0xf]
        %v445 = vld [vmem:[#allocation3 + $0xc] sm:$0xf]
        %v446 = vld [vmem:[#allocation3 + $0x10] sm:$0xf]
        %v447 = vld [vmem:[#allocation3 + $0x14] sm:$0xf]
        %v448 = vld [vmem:[#allocation3 + $0x18] sm:$0xf]
        %v449 = vld [vmem:[#allocation3 + $0x1c] sm:$0xf]
        %v450 = vld [vmem:[#allocation3 + $0x20] sm:$0xf]
        %v451 = vld [vmem:[#allocation3 + $0x24] sm:$0xf]
        %v452 = vld [vmem:[#allocation3 + $0x28] sm:$0xf]
        %v453 = vld [vmem:[#allocation3 + $0x2c] sm:$0xf]
        %v454 = vld [vmem:[#allocation3 + $0x30] sm:$0xf]
        %v455 = vld [vmem:[#allocation3 + $0x34] sm:$0xf]
        %v456 = vld [vmem:[#allocation3 + $0x38] sm:$0xf]
        %v457 = vld [vmem:[#allocation3 + $0x3c] sm:$0xf]
        %v474 = vunpack.c.l.b16 %v426
        %v475 = vunpack.c.l.b16 %v427
        %v476 = vunpack.c.l.b16 %v428
        %v477 = vunpack.c.l.b16 %v429
        %v478 = vunpack.c.l.b16 %v430
        %v479 = vunpack.c.l.b16 %v431
        %v480 = vunpack.c.l.b16 %v432
        %v481 = vunpack.c.l.b16 %v433
        %v482 = vunpack.c.l.b16 %v434
        %v483 = vunpack.c.l.b16 %v435
        %v484 = vunpack.c.l.b16 %v436
        %v485 = vunpack.c.l.b16 %v437
        %v486 = vunpack.c.l.b16 %v438
        %v487 = vunpack.c.l.b16 %v439
        %v488 = vunpack.c.l.b16 %v440
        %v489 = vunpack.c.l.b16 %v441
        %v490 = vpack.c.b16 %v475, %v474
        %v491 = vpack.c.b16 %v477, %v476
        %v492 = vpack.c.b16 %v479, %v478
        %v493 = vpack.c.b16 %v481, %v480
        %v494 = vpack.c.b16 %v483, %v482
        %v495 = vpack.c.b16 %v485, %v484
        %v496 = vpack.c.b16 %v487, %v486
        %v497 = vpack.c.b16 %v489, %v488
        %v522 = vunpack.c.l.b16 %v442
        %v523 = vunpack.c.l.b16 %v443
        %v524 = vunpack.c.l.b16 %v444
        %v525 = vunpack.c.l.b16 %v445
        %v526 = vunpack.c.l.b16 %v446
        %v527 = vunpack.c.l.b16 %v447
        %v528 = vunpack.c.l.b16 %v448
        %v529 = vunpack.c.l.b16 %v449
        %v530 = vunpack.c.l.b16 %v450
        %v531 = vunpack.c.l.b16 %v451
        %v532 = vunpack.c.l.b16 %v452
        %v533 = vunpack.c.l.b16 %v453
        %v534 = vunpack.c.l.b16 %v454
        %v535 = vunpack.c.l.b16 %v455
        %v536 = vunpack.c.l.b16 %v456
        %v537 = vunpack.c.l.b16 %v457
        %v538 = vpack.c.b16 %v523, %v522
        %v539 = vpack.c.b16 %v525, %v524
        %v540 = vpack.c.b16 %v527, %v526
        %v541 = vpack.c.b16 %v529, %v528
        %v542 = vpack.c.b16 %v531, %v530
        %v543 = vpack.c.b16 %v533, %v532
        %v544 = vpack.c.b16 %v535, %v534
        %v545 = vpack.c.b16 %v537, %v536
        %554 = vmatpush.bf16.msra.mxu0 %v545
        %555 = vmatpush.bf16.msra.mxu0 %v544
        %556 = vmatpush.bf16.msra.mxu0 %v543
        %557 = vmatpush.bf16.msra.mxu0 %v542
        %558 = vmatpush.bf16.msra.mxu0 %v541
        %559 = vmatpush.bf16.msra.mxu0 %v540
        %560 = vmatpush.bf16.msra.mxu0 %v539
        %561 = vmatpush.bf16.msra.mxu0 %v538
        %562 = vmatmul.bf16.gmra.mxu0 %v490
        %v563 = vpop.f32.mrf.mxu0
        %v564 = vadd.f32 0.0, %v563
        %v565 = vpop.f32.mrf.mxu0
        %v566 = vadd.f32 0.0, %v565
        %567 = vmatmul.bf16.gmra.mxu0 %v491
        %v568 = vpop.f32.mrf.mxu0
        %v569 = vadd.f32 0.0, %v568
        %v570 = vpop.f32.mrf.mxu0
        %v571 = vadd.f32 0.0, %v570
        %572 = vmatmul.bf16.gmra.mxu0 %v492
        %v573 = vpop.f32.mrf.mxu0
        %v574 = vadd.f32 0.0, %v573
        %v575 = vpop.f32.mrf.mxu0
        %v576 = vadd.f32 0.0, %v575
        %577 = vmatmul.bf16.gmra.mxu0 %v493
        %v578 = vpop.f32.mrf.mxu0
        %v579 = vadd.f32 0.0, %v578
        %v580 = vpop.f32.mrf.mxu0
        %v581 = vadd.f32 0.0, %v580
        %582 = vmatmul.bf16.gmra.mxu0 %v494
        %v583 = vpop.f32.mrf.mxu0
        %v584 = vadd.f32 0.0, %v583
        %v585 = vpop.f32.mrf.mxu0
        %v586 = vadd.f32 0.0, %v585
        %587 = vmatmul.bf16.gmra.mxu0 %v495
        %v588 = vpop.f32.mrf.mxu0
        %v589 = vadd.f32 0.0, %v588
        %v590 = vpop.f32.mrf.mxu0
        %v591 = vadd.f32 0.0, %v590
        %592 = vmatmul.bf16.gmra.mxu0 %v496
        %v593 = vpop.f32.mrf.mxu0
        %v594 = vadd.f32 0.0, %v593
        %v595 = vpop.f32.mrf.mxu0
        %v596 = vadd.f32 0.0, %v595
        %597 = vmatmul.bf16.gmra.mxu0 %v497
        %v598 = vpop.f32.mrf.mxu0
        %v599 = vadd.f32 0.0, %v598
        %v600 = vpop.f32.mrf.mxu0
        %v601 = vadd.f32 0.0, %v600
        %602 = vdwg.mxu0
        %v603 = vpack.c.bf16 %v566, %v564
        %v604 = vpack.c.bf16 %v571, %v569
        %v605 = vpack.c.bf16 %v576, %v574
        %v606 = vpack.c.bf16 %v581, %v579
        %v607 = vpack.c.bf16 %v586, %v584
        %v608 = vpack.c.bf16 %v591, %v589
        %v609 = vpack.c.bf16 %v596, %v594
        %v610 = vpack.c.bf16 %v601, %v599
        %v611 = vld [vmem:[%s293] sm:$0xf]
        %v612 = vld [vmem:[%s293 + $0x4] sm:$0xf]
        %v613 = vld [vmem:[%s293 + $0x8] sm:$0xf]
        %v614 = vld [vmem:[%s293 + $0xc] sm:$0xf]
        %v615 = vld [vmem:[%s293 + $0x10] sm:$0xf]
        %v616 = vld [vmem:[%s293 + $0x14] sm:$0xf]
        %v617 = vld [vmem:[%s293 + $0x18] sm:$0xf]
        %v618 = vld [vmem:[%s293 + $0x1c] sm:$0xf]
        %v619 = vld [vmem:[%s293 + $0x20] sm:$0xf]
        %v620 = vld [vmem:[%s293 + $0x24] sm:$0xf]
        %v621 = vld [vmem:[%s293 + $0x28] sm:$0xf]
        %v622 = vld [vmem:[%s293 + $0x2c] sm:$0xf]
        %v623 = vld [vmem:[%s293 + $0x30] sm:$0xf]
        %v624 = vld [vmem:[%s293 + $0x34] sm:$0xf]
        %v625 = vld [vmem:[%s293 + $0x38] sm:$0xf]
        %v626 = vld [vmem:[%s293 + $0x3c] sm:$0xf]
        %v643 = vunpack.c.l.b16 %v611
        %v644 = vunpack.c.l.b16 %v612
        %v645 = vunpack.c.l.b16 %v613
        %v646 = vunpack.c.l.b16 %v614
        %v647 = vunpack.c.l.b16 %v615
        %v648 = vunpack.c.l.b16 %v616
        %v649 = vunpack.c.l.b16 %v617
        %v650 = vunpack.c.l.b16 %v618
        %v651 = vunpack.c.l.b16 %v619
        %v652 = vunpack.c.l.b16 %v620
        %v653 = vunpack.c.l.b16 %v621
        %v654 = vunpack.c.l.b16 %v622
        %v655 = vunpack.c.l.b16 %v623
        %v656 = vunpack.c.l.b16 %v624
        %v657 = vunpack.c.l.b16 %v625
        %v658 = vunpack.c.l.b16 %v626
        %v659 = vpack.c.b16 %v644, %v643
        %v660 = vpack.c.b16 %v646, %v645
        %v661 = vpack.c.b16 %v648, %v647
        %v662 = vpack.c.b16 %v650, %v649
        %v663 = vpack.c.b16 %v652, %v651
        %v664 = vpack.c.b16 %v654, %v653
        %v665 = vpack.c.b16 %v656, %v655
        %v666 = vpack.c.b16 %v658, %v657
        %675 = vmatpush.bf16.msra.mxu0 %v666
        %676 = vmatpush.bf16.msra.mxu0 %v665
        %677 = vmatpush.bf16.msra.mxu0 %v664
        %678 = vmatpush.bf16.msra.mxu0 %v663
        %679 = vmatpush.bf16.msra.mxu0 %v662
        %680 = vmatpush.bf16.msra.mxu0 %v661
        %681 = vmatpush.bf16.msra.mxu0 %v660
        %682 = vmatpush.bf16.msra.mxu0 %v659
        %683 = vmatmul.bf16.gmra.mxu0 %v603
        %v684 = vpop.f32.mrf.mxu0
        %v685 = vadd.f32 0.0, %v684
        %v686 = vpop.f32.mrf.mxu0
        %v687 = vadd.f32 0.0, %v686
        %688 = vmatmul.bf16.gmra.mxu0 %v604
        %v689 = vpop.f32.mrf.mxu0
        %v690 = vadd.f32 0.0, %v689
        %v691 = vpop.f32.mrf.mxu0
        %v692 = vadd.f32 0.0, %v691
        %693 = vmatmul.bf16.gmra.mxu0 %v605
        %v694 = vpop.f32.mrf.mxu0
        %v695 = vadd.f32 0.0, %v694
        %v696 = vpop.f32.mrf.mxu0
        %v697 = vadd.f32 0.0, %v696
        %698 = vmatmul.bf16.gmra.mxu0 %v606
        %v699 = vpop.f32.mrf.mxu0
        %v700 = vadd.f32 0.0, %v699
        %v701 = vpop.f32.mrf.mxu0
        %v702 = vadd.f32 0.0, %v701
        %703 = vmatmul.bf16.gmra.mxu0 %v607
        %v704 = vpop.f32.mrf.mxu0
        %v705 = vadd.f32 0.0, %v704
        %v706 = vpop.f32.mrf.mxu0
        %v707 = vadd.f32 0.0, %v706
        %708 = vmatmul.bf16.gmra.mxu0 %v608
        %v709 = vpop.f32.mrf.mxu0
        %v710 = vadd.f32 0.0, %v709
        %v711 = vpop.f32.mrf.mxu0
        %v712 = vadd.f32 0.0, %v711
        %713 = vmatmul.bf16.gmra.mxu0 %v609
        %v714 = vpop.f32.mrf.mxu0
        %v715 = vadd.f32 0.0, %v714
        %v716 = vpop.f32.mrf.mxu0
        %v717 = vadd.f32 0.0, %v716
        %718 = vmatmul.bf16.gmra.mxu0 %v610
        %v719 = vpop.f32.mrf.mxu0
        %v720 = vadd.f32 0.0, %v719
        %v721 = vpop.f32.mrf.mxu0
        %v722 = vadd.f32 0.0, %v721
        %723 = vdwg.mxu0
        %s724 = smul.u32 %s24, 128
        %s725 = scalar_lea.vmem [#allocation2], %s724
        %v726 = vld [vmem:[%s725] sm:$0xff]
        %v727 = vld [vmem:[%s725 + $0x8] sm:$0xff]
        %v728 = vld [vmem:[%s725 + $0x10] sm:$0xff]
        %v729 = vld [vmem:[%s725 + $0x18] sm:$0xff]
        %v730 = vld [vmem:[%s725 + $0x20] sm:$0xff]
        %v731 = vld [vmem:[%s725 + $0x28] sm:$0xff]
        %v732 = vld [vmem:[%s725 + $0x30] sm:$0xff]
        %v733 = vld [vmem:[%s725 + $0x38] sm:$0xff]
        %v734 = vld [vmem:[%s725 + $0x40] sm:$0xff]
        %v735 = vld [vmem:[%s725 + $0x48] sm:$0xff]
        %v736 = vld [vmem:[%s725 + $0x50] sm:$0xff]
        %v737 = vld [vmem:[%s725 + $0x58] sm:$0xff]
        %v738 = vld [vmem:[%s725 + $0x60] sm:$0xff]
        %v739 = vld [vmem:[%s725 + $0x68] sm:$0xff]
        %v740 = vld [vmem:[%s725 + $0x70] sm:$0xff]
        %v741 = vld [vmem:[%s725 + $0x78] sm:$0xff]
        %p742 = scmp.gt.s32.totalorder %s23, 0
        %v743 = vadd.f32 %v685, %v726
        %v744 = vadd.f32 %v687, %v727
        %v745 = vadd.f32 %v690, %v728
        %v746 = vadd.f32 %v692, %v729
        %v747 = vadd.f32 %v695, %v730
        %v748 = vadd.f32 %v697, %v731
        %v749 = vadd.f32 %v700, %v732
        %v750 = vadd.f32 %v702, %v733
        %v751 = vadd.f32 %v705, %v734
        %v752 = vadd.f32 %v707, %v735
        %v753 = vadd.f32 %v710, %v736
        %v754 = vadd.f32 %v712, %v737
        %v755 = vadd.f32 %v715, %v738
        %v756 = vadd.f32 %v717, %v739
        %v757 = vadd.f32 %v720, %v740
        %v758 = vadd.f32 %v722, %v741
        %s759 = scalar_select %p742, 1, 0
        %v760 = vstv %s759
        %vm761 = vcmp.eq.s32.totalorder %v760, 1
        %v762 = vsel %vm761, %v743, %v685
        %v763 = vsel %vm761, %v744, %v687
        %v764 = vsel %vm761, %v745, %v690
        %v765 = vsel %vm761, %v746, %v692
        %v766 = vsel %vm761, %v747, %v695
        %v767 = vsel %vm761, %v748, %v697
        %v768 = vsel %vm761, %v749, %v700
        %v769 = vsel %vm761, %v750, %v702
        %v770 = vsel %vm761, %v751, %v705
        %v771 = vsel %vm761, %v752, %v707
        %v772 = vsel %vm761, %v753, %v710
        %v773 = vsel %vm761, %v754, %v712
        %v774 = vsel %vm761, %v755, %v715
        %v775 = vsel %vm761, %v756, %v717
        %v776 = vsel %vm761, %v757, %v720
        %v777 = vsel %vm761, %v758, %v722
        %v778 = vld [vmem:[%s302] sm:$0x1]
        %v780 = vperm.slane %v778, 0
        %v782 = vmul.f32 %v762, %v780
        %v783 = vmul.f32 %v763, %v780
        %v784 = vmul.f32 %v764, %v780
        %v785 = vmul.f32 %v765, %v780
        %v786 = vmul.f32 %v766, %v780
        %v787 = vmul.f32 %v767, %v780
        %v788 = vmul.f32 %v768, %v780
        %v789 = vmul.f32 %v769, %v780
        %v790 = vmul.f32 %v770, %v780
        %v791 = vmul.f32 %v771, %v780
        %v792 = vmul.f32 %v772, %v780
        %v793 = vmul.f32 %v773, %v780
        %v794 = vmul.f32 %v774, %v780
        %v795 = vmul.f32 %v775, %v780
        %v796 = vmul.f32 %v776, %v780
        %v797 = vmul.f32 %v777, %v780
        %v798 = vld [vmem:[%s335] sm:$0x1]
        %v800 = vperm.slane %v798, 0
        %v802 = vadd.f32 %v782, %v800
        %v803 = vadd.f32 %v783, %v800
        %v804 = vadd.f32 %v784, %v800
        %v805 = vadd.f32 %v785, %v800
        %v806 = vadd.f32 %v786, %v800
        %v807 = vadd.f32 %v787, %v800
        %v808 = vadd.f32 %v788, %v800
        %v809 = vadd.f32 %v789, %v800
        %v810 = vadd.f32 %v790, %v800
        %v811 = vadd.f32 %v791, %v800
        %v812 = vadd.f32 %v792, %v800
        %v813 = vadd.f32 %v793, %v800
        %v814 = vadd.f32 %v794, %v800
        %v815 = vadd.f32 %v795, %v800
        %v816 = vadd.f32 %v796, %v800
        %v817 = vadd.f32 %v797, %v800
        %v818 = vmax.f32 %v802, 0.0
        %v819 = vmax.f32 %v803, 0.0
        %v820 = vmax.f32 %v804, 0.0
        %v821 = vmax.f32 %v805, 0.0
        %v822 = vmax.f32 %v806, 0.0
        %v823 = vmax.f32 %v807, 0.0
        %v824 = vmax.f32 %v808, 0.0
        %v825 = vmax.f32 %v809, 0.0
        %v826 = vmax.f32 %v810, 0.0
        %v827 = vmax.f32 %v811, 0.0
        %v828 = vmax.f32 %v812, 0.0
        %v829 = vmax.f32 %v813, 0.0
        %v830 = vmax.f32 %v814, 0.0
        %v831 = vmax.f32 %v815, 0.0
        %v832 = vmax.f32 %v816, 0.0
        %v833 = vmax.f32 %v817, 0.0
        %834 = vst [vmem:[%s725] sm:$0xff] %v818
        %835 = vst [vmem:[%s725 + $0x8] sm:$0xff] %v819
        %836 = vst [vmem:[%s725 + $0x10] sm:$0xff] %v820
        %837 = vst [vmem:[%s725 + $0x18] sm:$0xff] %v821
        %838 = vst [vmem:[%s725 + $0x20] sm:$0xff] %v822
        %839 = vst [vmem:[%s725 + $0x28] sm:$0xff] %v823
        %840 = vst [vmem:[%s725 + $0x30] sm:$0xff] %v824
        %841 = vst [vmem:[%s725 + $0x38] sm:$0xff] %v825
        %842 = vst [vmem:[%s725 + $0x40] sm:$0xff] %v826
        %843 = vst [vmem:[%s725 + $0x48] sm:$0xff] %v827
        %844 = vst [vmem:[%s725 + $0x50] sm:$0xff] %v828
        %845 = vst [vmem:[%s725 + $0x58] sm:$0xff] %v829
        %846 = vst [vmem:[%s725 + $0x60] sm:$0xff] %v830
        %847 = vst [vmem:[%s725 + $0x68] sm:$0xff] %v831
        %848 = vst [vmem:[%s725 + $0x70] sm:$0xff] %v832
        %849 = vst [vmem:[%s725 + $0x78] sm:$0xff] %v833
        %850 = vst [vmem:[#allocation11] sm:$0xff] %v818
        %851 = vst [vmem:[#allocation11 + $0x8] sm:$0xff] %v819
        %852 = vst [vmem:[#allocation11 + $0x10] sm:$0xff] %v820
        %853 = vst [vmem:[#allocation11 + $0x18] sm:$0xff] %v821
        %854 = vst [vmem:[#allocation11 + $0x20] sm:$0xff] %v822
        %855 = vst [vmem:[#allocation11 + $0x28] sm:$0xff] %v823
        %856 = vst [vmem:[#allocation11 + $0x30] sm:$0xff] %v824
        %857 = vst [vmem:[#allocation11 + $0x38] sm:$0xff] %v825
        %858 = vst [vmem:[#allocation11 + $0x40] sm:$0xff] %v826
        %859 = vst [vmem:[#allocation11 + $0x48] sm:$0xff] %v827
        %860 = vst [vmem:[#allocation11 + $0x50] sm:$0xff] %v828
        %861 = vst [vmem:[#allocation11 + $0x58] sm:$0xff] %v829
        %862 = vst [vmem:[#allocation11 + $0x60] sm:$0xff] %v830
        %863 = vst [vmem:[#allocation11 + $0x68] sm:$0xff] %v831
        %864 = vst [vmem:[#allocation11 + $0x70] sm:$0xff] %v832
        %865 = vst [vmem:[#allocation11 + $0x78] sm:$0xff] %v833
        // Predicated region
        $region65: #{tpu_custom_call.1} parent=39 // pred_check
          %p866 = pneg %p174
        $region66: #{tpu_custom_call.1} parent=39 // pred_check_branch
          %868 = sbr.rel (%p866) target = $region68
        $region67: #{tpu_custom_call.1} parent=39 // pred_region
          %s869 = smul.u32 16, %s24
          %871 = vsyncadd [#allocation6], 0
          %s872 = smul.addr %s869, 8
          %s873 = scalar_lea.hbm %s5, %s872
          %s874 = sshll.u32 [#allocation11], 4
          %s875 = int_to_ptr.vmem [resolvable:$true] %s874
          %s876 = sshll.u32 %s873, 4
          %s877 = int_to_ptr.hbm [resolvable:$true] %s876
          %882 = dma.vmem_to_hbm [thread:$0]  %s875, 2048, %s877, [#allocation6], 128, 128, 8
        $region68: #{tpu_custom_call.1} parent=39 // pred_fallthru
          _
        // Predicated region
        $region69: #{tpu_custom_call.1} parent=39 // pred_check
          %p883 = pneg %p174
        $region70: #{tpu_custom_call.1} parent=39 // pred_check_branch
          %885 = sbr.rel (%p883) target = $region72
        $region71: #{tpu_custom_call.1} parent=39 // pred_region
          %887 = dma.done [#allocation6], 2048
        $region72: #{tpu_custom_call.1} parent=39 // pred_fallthru
          _
      $region40: #{tpu_custom_call.1} parent=5 // pred_fallthru
        _
      %p888 = scmp.le.s32.totalorder 2, %s14
      // Predicated region
      $region73: #{tpu_custom_call.1} parent=5 // pred_check
        %p889 = pneg %p888
      $region74: #{tpu_custom_call.1} parent=5 // pred_check_branch
        %891 = sbr.rel (%p889) target = $region76
      $region75: #{tpu_custom_call.1} parent=5 // pred_region
        %s892 = ssub.s32 %s14, 2
      $region76: #{tpu_custom_call.1} parent=5 // pred_fallthru
        _
    $region6: #{tpu_custom_call.1} parent=1 // loop_footer
      %s18 = sadd.s32 1, %s14
    $region7: #{tpu_custom_call.1} parent=1 // loop_footer_branch
      %13 = sbr.rel target = $region3
    $region8: #{tpu_custom_call.1} parent=1 // loop_exit
      _
    %893 = vsyncpa [#allocation5], 1
    %s894 = scalar_lea.sflag [#allocation5], 1
    %895 = vsyncpa %s894, 1
    %896 = vsyncpa [#allocation8], 1
    %897 = vsyncpa [#allocation6], 1
    %s898 = scalar_lea.sflag [#allocation6], 1
    %899 = vsyncpa %s898, 1

</llo_original>
